<compile_context>
chip_gen: v7x
topology: tpu7x:2x2x1
jax: 0.10.0
libtpu: 0.0.40
codegen_flags: <defaults>
</compile_context>

<pallas_src>
import math
import jax
import jax.numpy as jnp
from jax.experimental import pallas as pl
from jax.experimental.pallas import tpu as pltpu


def _round_up(x: int, m: int) -> int:
    return ((x + m - 1) // m) * m


# ----------------------------- kernels ---------------------------------------

def _dense_kernel_single(x_ref, w_ref, b_ref, o_ref):
    # x_ref: (TM, K)   activations
    # w_ref: (K, TN)   pre-transposed weight -> plain matmul, no in-kernel transpose
    # b_ref: (1, TN)   f32 bias row
    # o_ref: (TM, TN)  output tile (written exactly once)
    acc = jnp.dot(x_ref[...], w_ref[...], preferred_element_type=jnp.float32)
    o_ref[...] = (acc + b_ref[...]).astype(o_ref.dtype)


def _dense_kernel_ktiled_f32(x_ref, w_ref, b_ref, o_ref):
    # f32 output: accumulate directly into the resident output tile (no scratch).
    k = pl.program_id(2)

    @pl.when(k == 0)
    def _():
        o_ref[...] = jnp.zeros_like(o_ref)

    o_ref[...] += jnp.dot(x_ref[...], w_ref[...], preferred_element_type=jnp.float32)

    @pl.when(k == pl.num_programs(2) - 1)
    def _():
        o_ref[...] += b_ref[...]


def _dense_kernel_ktiled(x_ref, w_ref, b_ref, o_ref, acc_ref):
    # non-f32 output: f32 VMEM accumulator, cast once in the epilogue.
    k = pl.program_id(2)

    @pl.when(k == 0)
    def _():
        acc_ref[...] = jnp.zeros_like(acc_ref)

    acc_ref[...] += jnp.dot(x_ref[...], w_ref[...], preferred_element_type=jnp.float32)

    @pl.when(k == pl.num_programs(2) - 1)
    def _():
        o_ref[...] = (acc_ref[...] + b_ref[...]).astype(o_ref.dtype)


# -------------------------- sizing helpers ------------------------------------

def _vmem_budget_and_limit():
    """Generation-aware VMEM sizing. Falls back to a conservative v7x-sized cap."""
    try:
        cap = int(pltpu.get_tpu_info().vmem_capacity_bytes)
    except Exception:
        cap = 64 * 1024 * 1024          # conservative default (v7x physical VMEM)
    budget = min(int(cap * 0.6), 80 << 20)    # target double-buffered tile footprint
    limit = min(int(cap * 0.75), 100 << 20)   # scoped VMEM limit handed to Mosaic
    return budget, limit


def _footprint_bytes(tm, tn, tk, in_bytes, out_bytes, ktiled, out_is_f32):
    x_b = 2 * tm * tk * in_bytes        # double-buffered activation tile
    w_b = 2 * tk * tn * in_bytes        # double-buffered weight tile
    b_b = 2 * tn * 4                    # bias row (f32)
    o_b = 2 * tm * tn * out_bytes       # output tile
    acc = tm * tn * 4 if (ktiled and not out_is_f32) else 0
    return x_b + w_b + b_b + o_b + acc


# ------------------------- parameter preparation ------------------------------

def prepare_dense_params(weight, bias, *, compute_dtype=None):
    """One-time prep OUTSIDE the per-call path.

    weight: (d_out, d_in) PyTorch nn.Linear layout, bias: (d_out,).
    Pre-transposes to (d_in, d_out), pads to lane-aligned tile multiples and
    optionally casts to compute_dtype (bf16 recommended on v6e/v7x).
    """
    d_out, d_in = weight.shape
    if compute_dtype is not None:
        weight = weight.astype(compute_dtype)

    # Tile candidates along N (output) and K (reduction); 128-aligned minimum,
    # capped so a handful of tiles saturate the VMEM budget at call time.
    tn = min(_round_up(d_out, 128), 512)
    tk = min(_round_up(d_in, 128), 2048)
    n_pad = _round_up(d_out, tn)
    k_pad = _round_up(d_in, tk)

    w_t = jnp.pad(weight.T, ((0, k_pad - d_in), (0, n_pad - d_out)))          # (K_pad, N_pad)
    b_p = jnp.pad(bias.astype(jnp.float32), (0, n_pad - d_out)).reshape(1, n_pad)
    return {"w_t": w_t, "b": b_p, "d_out": d_out, "d_in": d_in, "TN": tn, "TK": tk}


# ------------------------------- forward --------------------------------------

def dense_forward(x, params, *, compute_dtype=None):
    """Pallas equivalent of Dense.forward.

    x: (B, input_dim); returns (B, output_dim, 1, 1).
    compute_dtype=jnp.bfloat16 recommended on v6e/v7x (f32 accumulation kept).
    """
    B, d_in = x.shape
    assert d_in == params["d_in"]
    d_out = params["d_out"]
    w_t, b_p = params["w_t"], params["b"]
    K_pad, N_pad = w_t.shape
    TN, TK = params["TN"], params["TK"]

    out_dtype = x.dtype
    if compute_dtype is not None:
        x = x.astype(compute_dtype)
    in_bytes = x.dtype.itemsize
    out_bytes = jnp.dtype(out_dtype).itemsize
    out_is_f32 = jnp.dtype(out_dtype) == jnp.dtype(jnp.float32)

    # Sublane alignment: 8 rows for 4-byte dtypes, 16 for bf16, 32 for 1-byte.
    m_align = 8 if in_bytes >= 4 else (16 if in_bytes == 2 else 32)
    B_al = _round_up(B, m_align)
    if B_al <= 1024:
        TM, M_pad = B_al, B_al          # whole batch in one M tile -> weight read once
    else:
        TM = 512
        M_pad = _round_up(B, TM)

    budget, vmem_limit = _vmem_budget_and_limit()

    # Prefer dropping the K grid axis entirely (single MXU pass per output tile).
    single = _footprint_bytes(TM, TN, K_pad, in_bytes, out_bytes, False, out_is_f32) <= budget
    if single:
        TK_eff = K_pad
    else:
        TK_eff = TK
        while (_footprint_bytes(TM, TN, TK_eff, in_bytes, out_bytes, True, out_is_f32) > budget
               and TK_eff > 256 and TK_eff % 2 == 0 and K_pad % (TK_eff // 2) == 0):
            TK_eff //= 2

    # v7x megacore: keep >=2 blocks along a parallel axis when the shape allows.
    if M_pad // TM == 1 and N_pad // TN == 1 and N_pad >= 256 and N_pad % 256 == 0:
        TN = N_pad // 2

    # Only the cheap activation padding stays in the per-call path.
    x_p = jnp.pad(x, ((0, M_pad - B), (0, K_pad - d_in)))

    if single:
        grid = (M_pad // TM, N_pad // TN)
        in_specs = [
            pl.BlockSpec((TM, K_pad), lambda i, j: (i, 0)),     # x
            pl.BlockSpec((K_pad, TN), lambda i, j: (0, j)),     # W^T (d_in, d_out)
            pl.BlockSpec((1, TN), lambda i, j: (0, j)),         # bias row
        ]
        out_spec = pl.BlockSpec((TM, TN), lambda i, j: (i, j))
        kernel = _dense_kernel_single
        scratch = []
        dims = ("parallel", "parallel")
    else:
        grid = (M_pad // TM, N_pad // TN, K_pad // TK_eff)
        in_specs = [
            pl.BlockSpec((TM, TK_eff), lambda i, j, k: (i, k)),
            pl.BlockSpec((TK_eff, TN), lambda i, j, k: (k, j)),
            pl.BlockSpec((1, TN), lambda i, j, k: (0, j)),
        ]
        out_spec = pl.BlockSpec((TM, TN), lambda i, j, k: (i, j))
        dims = ("parallel", "parallel", "arbitrary")
        if out_is_f32:
            kernel = _dense_kernel_ktiled_f32
            scratch = []
        else:
            kernel = _dense_kernel_ktiled
            scratch = [pltpu.VMEM((TM, TN), jnp.float32)]

    out_padded = pl.pallas_call(
        kernel,
        out_shape=jax.ShapeDtypeStruct((M_pad, N_pad), out_dtype),
        grid_spec=pltpu.PrefetchScalarGridSpec(
            num_scalar_prefetch=0,
            grid=grid,
            in_specs=in_specs,
            out_specs=out_spec,
            scratch_shapes=scratch,
        ),
        compiler_params=pltpu.CompilerParams(
            dimension_semantics=dims,
            vmem_limit_bytes=vmem_limit,
        ),
    )(x_p, w_t, b_p)

    # Strip padding, then append the two trailing singleton spatial dims
    # ([..., None, None] is reshape glue, done outside the kernel).
    out2d = out_padded[:B, :d_out]
    return out2d[..., None, None]


if __name__ == "__main__":
    # Small shapes consistent with the module: Dense(input_dim=32, output_dim=16)
    B, input_dim, output_dim = 2, 32, 16

    key = jax.random.PRNGKey(0)
    kx, kw, kb = jax.random.split(key, 3)

    # Deterministic init mirroring nn.Linear's uniform(-1/sqrt(in), 1/sqrt(in)).
    bound = 1.0 / math.sqrt(input_dim)
    weight = jax.random.uniform(kw, (output_dim, input_dim), jnp.float32, -bound, bound)
    bias = jax.random.uniform(kb, (output_dim,), jnp.float32, -bound, bound)
    x = jax.random.normal(kx, (B, input_dim), jnp.float32)

    # One-time parameter preparation (f32 exact path; use compute_dtype=jnp.bfloat16
    # on v6e/v7x for production and relax the tolerance accordingly).
    params = prepare_dense_params(weight, bias)

    out = dense_forward(x, params)
    out = jax.block_until_ready(out)

    # Sanity-check against plain JAX reference.
    ref = (x @ weight.T + bias)[..., None, None]
    assert out.shape == (B, output_dim, 1, 1)
    assert jnp.allclose(out, ref, atol=1e-5, rtol=1e-5)

    print("KERNEL_OK")
</pallas_src>

<mosaic_0001>
module attributes {stable_mosaic.version = 11 : i64} {
  func.func @_dense_kernel_single(%arg0: i32, %arg1: i32, %arg2: memref<8x128xf32, #tpu.memory_space<vmem>>, %arg3: memref<128x128xf32, #tpu.memory_space<vmem>>, %arg4: memref<1x128xf32, #tpu.memory_space<vmem>>, %arg5: memref<8x128xf32, #tpu.memory_space<vmem>>) attributes {dimension_semantics = [#tpu.dimension_semantics<parallel>, #tpu.dimension_semantics<parallel>], iteration_bounds = array<i64: 1, 1>, scalar_prefetch = 0 : i64, scratch_operands = 0 : i64, tpu.core_type = #tpu.core_type<tc>, window_params = [{transform_indices = @transform_0, window_bounds = array<i64: 8, 128>}, {transform_indices = @transform_1, window_bounds = array<i64: 128, 128>}, {transform_indices = @transform_2, window_bounds = array<i64: 1, 128>}, {transform_indices = @transform_3, window_bounds = array<i64: 8, 128>}]} {
    %c0 = arith.constant 0 : index
    %c0_0 = arith.constant 0 : index
    %0 = vector.load %arg2[%c0, %c0_0] : memref<8x128xf32, #tpu.memory_space<vmem>>, vector<8x128xf32>
    %c0_1 = arith.constant 0 : index
    %c0_2 = arith.constant 0 : index
    %1 = vector.load %arg3[%c0_1, %c0_2] : memref<128x128xf32, #tpu.memory_space<vmem>>, vector<128x128xf32>
    %cst = arith.constant dense<0.000000e+00> : vector<8x128xf32>
    %2 = tpu.matmul %0, %1, %cst {dimension_numbers = #tpu.dot_dimension_numbers<[1], [0], [0], [1], [0, 0, 1, 1], [], []>} : vector<8x128xf32>, vector<128x128xf32>, vector<8x128xf32> -> vector<8x128xf32>
    %c0_3 = arith.constant 0 : index
    %c0_4 = arith.constant 0 : index
    %3 = vector.load %arg4[%c0_3, %c0_4] : memref<1x128xf32, #tpu.memory_space<vmem>>, vector<1x128xf32>
    %4 = vector.broadcast %3 : vector<1x128xf32> to vector<8x128xf32>
    %5 = arith.addf %2, %4 : vector<8x128xf32>
    %c0_5 = arith.constant 0 : index
    %c0_6 = arith.constant 0 : index
    %6 = vector.load %arg5[%c0_5, %c0_6] : memref<8x128xf32, #tpu.memory_space<vmem>>, vector<8x128xf32>
    tpu.vector_store %arg5[%c0_5, %c0_6], %5 {strides = array<i32>} : memref<8x128xf32, #tpu.memory_space<vmem>>, vector<8x128xf32>,
    return
  }
  func.func @transform_0(%arg0: i32, %arg1: i32) -> (i32, i32) {
    %c0_i32 = arith.constant 0 : i32
    %c0_i32_0 = arith.constant 0 : i32
    return %arg0, %c0_i32 : i32, i32
  }
  func.func @transform_1(%arg0: i32, %arg1: i32) -> (i32, i32) {
    %c0_i32 = arith.constant 0 : i32
    %c0_i32_0 = arith.constant 0 : i32
    return %c0_i32, %arg1 : i32, i32
  }
  func.func @transform_2(%arg0: i32, %arg1: i32) -> (i32, i32) {
    %c0_i32 = arith.constant 0 : i32
    %c0_i32_0 = arith.constant 0 : i32
    return %c0_i32, %arg1 : i32, i32
  }
  func.func @transform_3(%arg0: i32, %arg1: i32) -> (i32, i32) {
    %c0_i32 = arith.constant 0 : i32
    return %arg0, %arg1 : i32, i32
  }
}

</mosaic_0001>

<llo_original>
// kernel: tpu_custom_call.1
$region0: #{tpu_custom_call.1}
  #allocation0 [shape = 'u32[]', space=smem, size = 0x4, offset = 0x4, fixed_abs, tag = 'smem constant byte address 0x4 - core index']
  #allocation1 [shape = 'u32[144,128]{1,0:T(1,128)}', space=vmem, size = 0x12000, scoped, tag = 'internal scratch']
  %s0 = inlined_call_operand.hbm [shape: f32[8,128], index: 0, kind: input, shape index: {}]
  %s1 = inlined_call_operand.hbm [shape: f32[128,128], index: 1, kind: input, shape index: {}]
  %s2 = inlined_call_operand.vmem [shape: f32[1,128], index: 2, kind: input, shape index: {}]
  %s3 = inlined_call_operand.hbm [shape: f32[8,128], index: 3, kind: output, shape index: {}]
  %s4 = sld [smem:[#allocation0]]
  $region30: #{tpu_custom_call.1} parent=0
    _
  %s6 = ssub.s32 1, %s4
  %s7 = scalar_select 0, %s6, %s4
  $region1: #{tpu_custom_call.1} parent=0
    #allocation2 [shape = 'u8[4096]{0}', space=vmem, size = 0x1000, scoped, tag = 'input window, operand 0, single buffered']
    #allocation3 [shape = 's32[1]{0}', space=sflag, size = 0x4, scoped, tag = 'scoped memory for tpu_custom_call.1']
    #allocation4 [shape = 's32[1]{0}', space=sflag, size = 0x4, scoped, tag = 'scoped memory for tpu_custom_call.1']
    #allocation5 [shape = 'u8[65536]{0}', space=vmem, size = 0x10000, scoped, tag = 'input window, operand 1, single buffered']
    #allocation6 [shape = 's32[1]{0}', space=sflag, size = 0x4, scoped, tag = 'scoped memory for tpu_custom_call.1']
    #allocation7 [shape = 'u8[4096]{0}', space=vmem, size = 0x1000, scoped, tag = 'output window, operand 0, single buffered']
    %8 = vsyncpa [#allocation3], 0
    %9 = vsyncpa [#allocation6], 0
    %10 = vsyncpa [#allocation4], 0
    // Predicated region
    $region2: #{tpu_custom_call.1} parent=1 // pred_check
      _
    $region3: #{tpu_custom_call.1} parent=1 // pred_check_branch
      %12 = sbr.rel (0) target = $region5
    $region4: #{tpu_custom_call.1} parent=1 // pred_region
      %s14 = ssub.s32 128, 128
      %15 = vsyncadd [#allocation3], %s14
      %s17 = sshll.u32 [#allocation2], 4
      %s18 = int_to_ptr.vmem [resolvable:$true] %s17
      %20 = dma.hbm_to_vmem [thread:$0]  %s0, 128, %s18, [#allocation3]
    $region5: #{tpu_custom_call.1} parent=1 // pred_fallthru
      _
    // Predicated region
    $region6: #{tpu_custom_call.1} parent=1 // pred_check
      _
    $region7: #{tpu_custom_call.1} parent=1 // pred_check_branch
      %22 = sbr.rel (0) target = $region9
    $region8: #{tpu_custom_call.1} parent=1 // pred_region
      %s24 = ssub.s32 2048, 2048
      %25 = vsyncadd [#allocation6], %s24
      %s26 = sshll.u32 [#allocation5], 4
      %s27 = int_to_ptr.vmem [resolvable:$true] %s26
      %32 = dma.hbm_to_vmem [thread:$0]  %s1, 2048, %s27, [#allocation6], 128, 128, 8
    $region9: #{tpu_custom_call.1} parent=1 // pred_fallthru
      _
    // Predicated region
    $region10: #{tpu_custom_call.1} parent=1 // pred_check
      _
    $region11: #{tpu_custom_call.1} parent=1 // pred_check_branch
      %34 = sbr.rel (0) target = $region13
    $region12: #{tpu_custom_call.1} parent=1 // pred_region
      _
    $region13: #{tpu_custom_call.1} parent=1 // pred_fallthru
      _
    // Predicated region
    $region14: #{tpu_custom_call.1} parent=1 // pred_check
      _
    $region15: #{tpu_custom_call.1} parent=1 // pred_check_branch
      %36 = sbr.rel (0) target = $region17
    $region16: #{tpu_custom_call.1} parent=1 // pred_region
      %37 = dma.done [#allocation3], 128
    $region17: #{tpu_custom_call.1} parent=1 // pred_fallthru
      _
    // Predicated region
    $region18: #{tpu_custom_call.1} parent=1 // pred_check
      _
    $region19: #{tpu_custom_call.1} parent=1 // pred_check_branch
      %39 = sbr.rel (0) target = $region21
    $region20: #{tpu_custom_call.1} parent=1 // pred_region
      %40 = dma.done [#allocation6], 2048
    $region21: #{tpu_custom_call.1} parent=1 // pred_fallthru
      _
    %v41 = vld [vmem:[#allocation2] sm:$0xff]
    %v42 = vld [vmem:[#allocation5] sm:$0xff]
    %v43 = vld [vmem:[#allocation5 + $0x8] sm:$0xff]
    %v44 = vld [vmem:[#allocation5 + $0x10] sm:$0xff]
    %v45 = vld [vmem:[#allocation5 + $0x18] sm:$0xff]
    %v46 = vld [vmem:[#allocation5 + $0x20] sm:$0xff]
    %v47 = vld [vmem:[#allocation5 + $0x28] sm:$0xff]
    %v48 = vld [vmem:[#allocation5 + $0x30] sm:$0xff]
    %v49 = vld [vmem:[#allocation5 + $0x38] sm:$0xff]
    %v50 = vld [vmem:[#allocation5 + $0x40] sm:$0xff]
    %v51 = vld [vmem:[#allocation5 + $0x48] sm:$0xff]
    %v52 = vld [vmem:[#allocation5 + $0x50] sm:$0xff]
    %v53 = vld [vmem:[#allocation5 + $0x58] sm:$0xff]
    %v54 = vld [vmem:[#allocation5 + $0x60] sm:$0xff]
    %v55 = vld [vmem:[#allocation5 + $0x68] sm:$0xff]
    %v56 = vld [vmem:[#allocation5 + $0x70] sm:$0xff]
    %v57 = vld [vmem:[#allocation5 + $0x78] sm:$0xff]
    %v58 = vld [vmem:[%s2] sm:$0x1]
    %v60 = vlaneseq
    %v61 = vshrl.u32 %v60, 7
    %v62 = vsub.s32 0, %v61
    %v63 = vrot.slane %v58, %v62
    %65 = vmatprep.subr.mxu0 0.0
    %66 = vmatpush1.msra.mxu0 %v42
    %67 = vmatprep.subr.mxu0 0.0
    %68 = vmatpush1.msra.mxu0 %v43
    %69 = vmatprep.subr.mxu0 0.0
    %70 = vmatpush1.msra.mxu0 %v44
    %71 = vmatprep.subr.mxu0 0.0
    %72 = vmatpush1.msra.mxu0 %v45
    %73 = vmatprep.subr.mxu0 0.0
    %74 = vmatpush1.msra.mxu0 %v46
    %75 = vmatprep.subr.mxu0 0.0
    %76 = vmatpush1.msra.mxu0 %v47
    %77 = vmatprep.subr.mxu0 0.0
    %78 = vmatpush1.msra.mxu0 %v48
    %79 = vmatprep.subr.mxu0 0.0
    %80 = vmatpush1.msra.mxu0 %v49
    %81 = vmatprep.subr.mxu0 0.0
    %82 = vmatpush1.msra.mxu0 %v50
    %83 = vmatprep.subr.mxu0 0.0
    %84 = vmatpush1.msra.mxu0 %v51
    %85 = vmatprep.subr.mxu0 0.0
    %86 = vmatpush1.msra.mxu0 %v52
    %87 = vmatprep.subr.mxu0 0.0
    %88 = vmatpush1.msra.mxu0 %v53
    %89 = vmatprep.subr.mxu0 0.0
    %90 = vmatpush1.msra.mxu0 %v54
    %91 = vmatprep.subr.mxu0 0.0
    %92 = vmatpush1.msra.mxu0 %v55
    %93 = vmatprep.subr.mxu0 0.0
    %94 = vmatpush1.msra.mxu0 %v56
    %95 = vmatprep.subr.mxu0 0.0
    %96 = vmatpush1.msra.mxu0 %v57
    %97 = vmatprep.subr.mxu0 0.0
    %98 = vmatpush1.msra.mxu0 0.0
    %99 = vmatprep.subr.mxu0 0.0
    %100 = vmatpush1.msra.mxu0 0.0
    %101 = vmatprep.subr.mxu0 0.0
    %102 = vmatpush1.msra.mxu0 0.0
    %103 = vmatprep.subr.mxu0 0.0
    %104 = vmatpush1.msra.mxu0 0.0
    %105 = vmatprep.subr.mxu0 0.0
    %106 = vmatpush1.msra.mxu0 0.0
    %107 = vmatprep.subr.mxu0 0.0
    %108 = vmatpush1.msra.mxu0 0.0
    %109 = vmatprep.subr.mxu0 0.0
    %110 = vmatpush1.msra.mxu0 0.0
    %111 = vmatprep.subr.mxu0 0.0
    %112 = vmatpush1.msra.mxu0 0.0
    %113 = vmatprep.subr.mxu0 0.0
    %114 = vmatpush1.msra.mxu0 0.0
    %115 = vmatprep.subr.mxu0 0.0
    %116 = vmatpush1.msra.mxu0 0.0
    %117 = vmatprep.subr.mxu0 0.0
    %118 = vmatpush1.msra.mxu0 0.0
    %119 = vmatprep.subr.mxu0 0.0
    %120 = vmatpush1.msra.mxu0 0.0
    %121 = vmatprep.subr.mxu0 0.0
    %122 = vmatpush1.msra.mxu0 0.0
    %123 = vmatprep.subr.mxu0 0.0
    %124 = vmatpush1.msra.mxu0 0.0
    %125 = vmatprep.subr.mxu0 0.0
    %126 = vmatpush1.msra.mxu0 0.0
    %127 = vmatprep.subr.mxu0 0.0
    %128 = vmatpush1.msra.mxu0 0.0
    %129 = vmatprep.mubr.f32.mxu0 0.0
    %130 = vmatmul.mubr.f32.gmra.mrb[0].mxu0 %v41
    %v131 = vpop.f32.mrb[0].mxu0
    %v132 = vadd.f32 %v63, %v131
    %v133 = vpop.f32.mrb[0].mxu0
    %134 = vdwg.mxu0
    %135 = vst [vmem:[#allocation7] sm:$0xff] %v132
    // Predicated region
    $region22: #{tpu_custom_call.1} parent=1 // pred_check
      _
    $region23: #{tpu_custom_call.1} parent=1 // pred_check_branch
      %137 = sbr.rel (0) target = $region25
    $region24: #{tpu_custom_call.1} parent=1 // pred_region
      %s139 = ssub.s32 128, 128
      %140 = vsyncadd [#allocation4], %s139
      %s142 = sshll.u32 [#allocation7], 4
      %s143 = int_to_ptr.vmem [resolvable:$true] %s142
      %145 = dma.vmem_to_hbm [thread:$0]  %s143, 128, %s3, [#allocation4]
    $region25: #{tpu_custom_call.1} parent=1 // pred_fallthru
      _
    // Predicated region
    $region26: #{tpu_custom_call.1} parent=1 // pred_check
      _
    $region27: #{tpu_custom_call.1} parent=1 // pred_check_branch
      %147 = sbr.rel (0) target = $region29
    $region28: #{tpu_custom_call.1} parent=1 // pred_region
      %148 = dma.done [#allocation4], 128
    $region29: #{tpu_custom_call.1} parent=1 // pred_fallthru
      _
    %149 = vsyncpa [#allocation3], 1
    %150 = vsyncpa [#allocation6], 1
    %151 = vsyncpa [#allocation4], 1

</llo_original>
